<compile_context>
chip_gen: v6e
topology: v6e:2x2x1
jax: 0.10.0
libtpu: 0.0.40
codegen_flags: <defaults>
</compile_context>

<pallas_src>
import jax
import jax.numpy as jnp
from jax.experimental import pallas as pl
from jax.experimental.pallas import tpu as pltpu


def _linear11_kernel(x_ref, w_ref, b_ref, o_ref):
    # x_ref/o_ref: (tile_r, LANE) lane-dense VMEM blocks.
    # w_ref/b_ref: (1,) scalars in SMEM. Hoist the scalar loads once per tile
    # so the broadcast stays out of the per-element hot expression.
    w = w_ref[0]
    b = b_ref[0]
    o_ref[...] = x_ref[...] * w + b


def linear11(x, weight, bias, *, lane=512, tile_rows=1024):
    """y = x @ weight.T + bias for nn.Linear(1, 1).

    x: (B, 1) f32; weight: (1, 1) f32; bias: (1,) f32 -> (B, 1) f32.

    The (B, 1) input is flattened and repacked as a lane-dense (rows, lane)
    slab (zero-padded tail), processed in (tile_rows, lane) blocks
    (~2 MiB f32 by default -> 4 live double-buffers ~8 MiB, fits every
    generation's scoped-VMEM default), and the result is sliced/reshaped back.
    """
    orig_shape = x.shape
    n = x.size
    flat = x.reshape(-1)

    rows = -(-n // lane)  # cdiv(n, lane)
    if rows <= tile_rows:
        # Single block whose shape equals the full array dims (always legal).
        tile_r = rows
    else:
        # tile_rows is a multiple of 8 -> valid sublane tiling; round rows up.
        tile_r = tile_rows
        rows = -(-rows // tile_r) * tile_r

    padded = rows * lane
    if padded != n:
        flat = jnp.pad(flat, (0, padded - n))
    slab = flat.reshape(rows, lane)

    w_flat = weight.reshape((1,)).astype(x.dtype)
    b_flat = bias.reshape((1,)).astype(x.dtype)

    out = pl.pallas_call(
        _linear11_kernel,
        out_shape=jax.ShapeDtypeStruct((rows, lane), x.dtype),
        grid=(rows // tile_r,),
        in_specs=[
            pl.BlockSpec((tile_r, lane), lambda i: (i, 0)),
            pl.BlockSpec(memory_space=pltpu.MemorySpace.SMEM),
            pl.BlockSpec(memory_space=pltpu.MemorySpace.SMEM),
        ],
        out_specs=pl.BlockSpec((tile_r, lane), lambda i: (i, 0)),
        compiler_params=pltpu.CompilerParams(
            # Row tiles are fully independent: lets Mosaic shard them across
            # both TensorCores on v7x (no-op on v5e/v6e).
            dimension_semantics=("parallel",),
        ),
    )(slab, w_flat, b_flat)

    return out.reshape(-1)[:n].reshape(orig_shape)


def init_params(key):
    # torch.nn.Linear(1, 1) default init: U(-1/sqrt(fan_in), 1/sqrt(fan_in)), fan_in=1.
    kw, kb = jax.random.split(key)
    bound = 1.0
    weight = jax.random.uniform(kw, (1, 1), jnp.float32, -bound, bound)
    bias = jax.random.uniform(kb, (1,), jnp.float32, -bound, bound)
    return weight, bias


if __name__ == "__main__":
    key = jax.random.PRNGKey(0)
    kparams, kx = jax.random.split(key)
    weight, bias = init_params(kparams)

    # Small input analogous to hour_var = [[4.0]], batched to B=2.
    x_small = jnp.array([[4.0], [2.5]], dtype=jnp.float32)
    y_small = linear11(x_small, weight, bias)
    jax.block_until_ready(y_small)
    ref_small = x_small @ weight.T + bias
    assert jnp.allclose(y_small, ref_small, atol=1e-6), (y_small, ref_small)

    # Larger batch with a ragged tail to exercise the padded, multi-tile path
    # (small lane/tile so the grid actually has several steps).
    x_big = jax.random.normal(kx, (3000, 1), jnp.float32)
    y_big = linear11(x_big, weight, bias, lane=128, tile_rows=8)
    jax.block_until_ready(y_big)
    ref_big = x_big @ weight.T + bias
    assert jnp.allclose(y_big, ref_big, atol=1e-5), "large-batch mismatch"

    print("KERNEL_OK")
</pallas_src>

<mosaic_0001>
module attributes {stable_mosaic.version = 11 : i64} {
  func.func @_linear11_kernel(%arg0: i32, %arg1: memref<1x512xf32, #tpu.memory_space<vmem>>, %arg2: memref<1xf32, #tpu.memory_space<smem>>, %arg3: memref<1xf32, #tpu.memory_space<smem>>, %arg4: memref<1x512xf32, #tpu.memory_space<vmem>>) attributes {dimension_semantics = [#tpu.dimension_semantics<parallel>], iteration_bounds = array<i64: 1>, scalar_prefetch = 0 : i64, scratch_operands = 0 : i64, tpu.core_type = #tpu.core_type<tc>, window_params = [{transform_indices = @transform_0, window_bounds = array<i64: 1, 512>}, {transform_indices = @transform_1, window_bounds = array<i64: 1>}, {transform_indices = @transform_2, window_bounds = array<i64: 1>}, {transform_indices = @transform_3, window_bounds = array<i64: 1, 512>}]} {
    %c0 = arith.constant 0 : index
    %0 = memref.load %arg2[%c0] : memref<1xf32, #tpu.memory_space<smem>>
    %c0_0 = arith.constant 0 : index
    %1 = memref.load %arg3[%c0_0] : memref<1xf32, #tpu.memory_space<smem>>
    %c0_1 = arith.constant 0 : index
    %c0_2 = arith.constant 0 : index
    %2 = vector.load %arg1[%c0_1, %c0_2] : memref<1x512xf32, #tpu.memory_space<vmem>>, vector<1x512xf32>
    %3 = vector.broadcast %0 : f32 to vector<1x512xf32>
    %4 = arith.mulf %2, %3 : vector<1x512xf32>
    %5 = vector.broadcast %1 : f32 to vector<1x512xf32>
    %6 = arith.addf %4, %5 : vector<1x512xf32>
    %c0_3 = arith.constant 0 : index
    %c0_4 = arith.constant 0 : index
    %7 = vector.load %arg4[%c0_3, %c0_4] : memref<1x512xf32, #tpu.memory_space<vmem>>, vector<1x512xf32>
    tpu.vector_store %arg4[%c0_3, %c0_4], %6 {strides = array<i32>} : memref<1x512xf32, #tpu.memory_space<vmem>>, vector<1x512xf32>,
    return
  }
  func.func @transform_0(%arg0: i32) -> (i32, i32) {
    %c0_i32 = arith.constant 0 : i32
    %c0_i32_0 = arith.constant 0 : i32
    return %arg0, %c0_i32 : i32, i32
  }
  func.func @transform_1(%arg0: i32) -> i32 {
    %c0_i32 = arith.constant 0 : i32
    %c0_i32_0 = arith.constant 0 : i32
    return %c0_i32 : i32
  }
  func.func @transform_2(%arg0: i32) -> i32 {
    %c0_i32 = arith.constant 0 : i32
    %c0_i32_0 = arith.constant 0 : i32
    return %c0_i32 : i32
  }
  func.func @transform_3(%arg0: i32) -> (i32, i32) {
    %c0_i32 = arith.constant 0 : i32
    %c0_i32_0 = arith.constant 0 : i32
    return %arg0, %c0_i32 : i32, i32
  }
}

</mosaic_0001>

<llo_original>
// kernel: tpu_custom_call.1
$region0: #{tpu_custom_call.1}
  #allocation0 [shape = 'u32[]', space=smem, size = 0x4, offset = 0x4, fixed_abs, tag = 'smem constant byte address 0x4 - core index']
  #allocation1 [shape = 'u32[144,128]{1,0:T(1,128)}', space=vmem, size = 0x12000, scoped, tag = 'internal scratch']
  #allocation2 [shape = 'f32[1]{0:T(128)S(6)}', space=smem, size = 0x200, scoped, tag = 'scoped memory for tpu_custom_call.1']
  #allocation3 [shape = 'f32[1]{0:T(128)S(6)}', space=smem, size = 0x200, scoped, tag = 'scoped memory for tpu_custom_call.1']
  %s0 = inlined_call_operand.vmem [shape: f32[1,512], index: 0, kind: input, shape index: {}]
  %s1 = inlined_call_operand.<no memory space> [shape: f32[1], index: 1, kind: input, shape index: {}]
  %s2 = inlined_call_operand.<no memory space> [shape: f32[1], index: 2, kind: input, shape index: {}]
  %s3 = inlined_call_operand.hbm [shape: f32[1,512], index: 3, kind: output, shape index: {}]
  %s4 = sld [smem:[#allocation0]]
  $region22: #{tpu_custom_call.1} parent=0
    _
  %s6 = ssub.s32 1, %s4
  %s7 = scalar_select 0, %s6, %s4
  %8 = sst [smem:[#allocation2]] %s1
  %9 = sst [smem:[#allocation3]] %s2
  $region1: #{tpu_custom_call.1} parent=0
    #allocation4 [shape = 'u8[2048]{0}', space=vmem, size = 0x800, scoped, tag = 'output window, operand 0, single buffered']
    #allocation5 [shape = 's32[1]{0}', space=sflag, size = 0x4, scoped, tag = 'scoped memory for tpu_custom_call.1']
    %10 = vsyncpa [#allocation5], 0
    // Predicated region
    $region2: #{tpu_custom_call.1} parent=1 // pred_check
      _
    $region3: #{tpu_custom_call.1} parent=1 // pred_check_branch
      %12 = sbr.rel (0) target = $region5
    $region4: #{tpu_custom_call.1} parent=1 // pred_region
      _
    $region5: #{tpu_custom_call.1} parent=1 // pred_fallthru
      _
    // Predicated region
    $region6: #{tpu_custom_call.1} parent=1 // pred_check
      _
    $region7: #{tpu_custom_call.1} parent=1 // pred_check_branch
      %14 = sbr.rel (0) target = $region9
    $region8: #{tpu_custom_call.1} parent=1 // pred_region
      _
    $region9: #{tpu_custom_call.1} parent=1 // pred_fallthru
      _
    // Predicated region
    $region10: #{tpu_custom_call.1} parent=1 // pred_check
      _
    $region11: #{tpu_custom_call.1} parent=1 // pred_check_branch
      %16 = sbr.rel (0) target = $region13
    $region12: #{tpu_custom_call.1} parent=1 // pred_region
      _
    $region13: #{tpu_custom_call.1} parent=1 // pred_fallthru
      _
    %s17 = sld [smem:[#allocation2]]
    %s18 = sld [smem:[#allocation3]]
    %v19 = vld [vmem:[%s0] sm:$0xf]
    %v20 = vstv %s17
    %v21 = vmul.f32 %v19, %v20
    %v22 = vstv %s18
    %v23 = vadd.f32 %v21, %v22
    %v24 = vlaneseq
    %vm25 = vcmp.ge.s32.totalorder %v24, 0
    %vm26 = vcmp.lt.s32.totalorder %v24, 512
    %vm27 = vmand %vm25, %vm26
    %28 = vst.msk [vmem:[#allocation4] sm:$0xf] %vm27, %v23
    // Predicated region
    $region14: #{tpu_custom_call.1} parent=1 // pred_check
      _
    $region15: #{tpu_custom_call.1} parent=1 // pred_check_branch
      %30 = sbr.rel (0) target = $region17
    $region16: #{tpu_custom_call.1} parent=1 // pred_region
      %s32 = ssub.s32 64, 64
      %33 = vsyncadd [#allocation5], %s32
      %s35 = sshll.u32 [#allocation4], 4
      %s36 = int_to_ptr.vmem [resolvable:$true] %s35
      %38 = dma.vmem_to_hbm [thread:$0]  %s36, 64, %s3, [#allocation5]
    $region17: #{tpu_custom_call.1} parent=1 // pred_fallthru
      _
    // Predicated region
    $region18: #{tpu_custom_call.1} parent=1 // pred_check
      _
    $region19: #{tpu_custom_call.1} parent=1 // pred_check_branch
      %40 = sbr.rel (0) target = $region21
    $region20: #{tpu_custom_call.1} parent=1 // pred_region
      %41 = dma.done [#allocation5], 64
    $region21: #{tpu_custom_call.1} parent=1 // pred_fallthru
      _
    %42 = vsyncpa [#allocation5], 1

</llo_original>
